<compile_context>
chip_gen: v7x
topology: tpu7x:2x2x1
jax: 0.10.0
libtpu: 0.0.40
codegen_flags: <defaults>
</compile_context>

<pallas_src>
import jax
import jax.numpy as jnp
from jax import lax
from jax.experimental import pallas as pl
from jax.experimental.pallas import tpu as pltpu

_EPS = 1e-5                      # nn.BatchNorm1d default eps
_MM_DTYPE = jnp.float32          # see header comment (set to jnp.bfloat16 for large C)
_VMEM_BUDGET = 40 * (1 << 20)    # stay comfortably inside v7x's 64 MiB physical VMEM


def _elu(y):
    # ELU with alpha=1; clamp the exp arg so the unselected branch is safe.
    return jnp.where(y > 0, y, jnp.exp(jnp.minimum(y, 0.0)) - 1.0)


def _conv1d_k3(x, wstack):
    """x: (Ci, L) f32 tile in CL layout.  wstack: (Co, 3*Ci).  Returns (Co, L) f32.

    Shifts use pltpu.roll on the lane axis (XLU slot) + boundary masks; the
    three taps are fused into a single MXU contraction with K = 3*Ci.
    """
    ci, l = x.shape
    lane = lax.broadcasted_iota(jnp.int32, (ci, l), 1)
    x_m1 = jnp.where(lane == 0, 0.0, pltpu.roll(x, 1, axis=1))          # x[:, l-1]
    x_p1 = jnp.where(lane == l - 1, 0.0, pltpu.roll(x, l - 1, axis=1))  # x[:, l+1]
    xs = jnp.concatenate([x_m1, x, x_p1], axis=0).astype(wstack.dtype)  # (3*Ci, L)
    return jnp.dot(wstack, xs, preferred_element_type=jnp.float32)      # (Co, L)


# --------------------------- fused kernel ------------------------------------

def _fused_residual_kernel(x_ref, w1_ref, w2_ref, g1_ref, b1_ref, g2_ref, b2_ref,
                           out_ref, y1_ref, y2_ref):
    n, _, l = x_ref.shape
    co = w1_ref.shape[0]
    inv_cnt = 1.0 / float(n * l)

    w1 = w1_ref[...]
    w2 = w2_ref[...]

    # ---- conv1 (whole batch), channel sums ----------------------------------
    s1 = jnp.zeros((co, 1), jnp.float32)
    for i in range(n):                                   # n is static; unrolled
        y = _conv1d_k3(x_ref[i].astype(jnp.float32), w1)
        y1_ref[i] = y
        s1 = s1 + jnp.sum(y, axis=1, keepdims=True)
    mean1 = s1 * inv_cnt

    # centered (two-pass) variance: y1 is VMEM resident, second pass is cheap
    ss1 = jnp.zeros((co, 1), jnp.float32)
    for i in range(n):
        d = y1_ref[i] - mean1
        ss1 = ss1 + jnp.sum(d * d, axis=1, keepdims=True)
    inv_std1 = lax.rsqrt(ss1 * inv_cnt + _EPS)           # EUP
    scale1 = g1_ref[...] * inv_std1                      # (C, 1)
    shift1 = b1_ref[...] - mean1 * scale1

    # ---- bn1 + elu + conv2, channel sums ------------------------------------
    s2 = jnp.zeros((co, 1), jnp.float32)
    for i in range(n):
        a = _elu(y1_ref[i] * scale1 + shift1)
        y = _conv1d_k3(a, w2)
        y2_ref[i] = y
        s2 = s2 + jnp.sum(y, axis=1, keepdims=True)
    mean2 = s2 * inv_cnt

    ss2 = jnp.zeros((co, 1), jnp.float32)
    for i in range(n):
        d = y2_ref[i] - mean2
        ss2 = ss2 + jnp.sum(d * d, axis=1, keepdims=True)
    inv_std2 = lax.rsqrt(ss2 * inv_cnt + _EPS)
    scale2 = g2_ref[...] * inv_std2
    shift2 = b2_ref[...] - mean2 * scale2

    # ---- bn2 + residual add + elu, single HBM write --------------------------
    for i in range(n):
        out_ref[i] = _elu(x_ref[i].astype(jnp.float32)
                          + y2_ref[i] * scale2 + shift2).astype(out_ref.dtype)


# --------------------------- wrapper ------------------------------------------

def _full_spec(shape):
    nd = len(shape)
    return pl.BlockSpec(shape, lambda i, _nd=nd: (0,) * _nd)


def residual_forward(x_ncl, params):
    """x_ncl: (N, Cin, L) like PyTorch Conv1d input. Returns (N, Cout, L), x's dtype."""
    n, cin, l = x_ncl.shape
    cout = params["w1"].shape[0]
    assert cin == cout, "identity shortcut requires in_channels == out_channels"

    # Stack the 3 taps along the contraction dim: (Co, Ci, 3) -> (Co, 3*Ci),
    # column index k*Ci + ci holds w[co, ci, k].  (Tiny, one-time, outside kernel.)
    w1s = jnp.transpose(params["w1"], (0, 2, 1)).reshape(cout, 3 * cin).astype(_MM_DTYPE)
    w2s = jnp.transpose(params["w2"], (0, 2, 1)).reshape(cout, 3 * cout).astype(_MM_DTYPE)
    # Conv biases b1/b2 intentionally unused: training-mode BatchNorm's mean
    # subtraction cancels any per-channel constant added before it.
    g1 = params["gamma1"].astype(jnp.float32).reshape(cout, 1)
    b1 = params["beta1"].astype(jnp.float32).reshape(cout, 1)
    g2 = params["gamma2"].astype(jnp.float32).reshape(cout, 1)
    b2 = params["beta2"].astype(jnp.float32).reshape(cout, 1)

    # Explicit VMEM budget (double-buffered I/O + resident y1/y2 scratch + weights).
    elems = n * cout * l
    x_bytes = x_ncl.dtype.itemsize
    vmem_needed = (2 * elems * x_bytes            # x (pipelined input buffers)
                   + 2 * elems * x_bytes          # out
                   + 2 * elems * 4                # y1 + y2 scratch (f32)
                   + 2 * 2 * cout * 3 * cout * jnp.dtype(_MM_DTYPE).itemsize
                   + 2 * 4 * cout * 4)
    if vmem_needed > _VMEM_BUDGET:
        # TODO(synk): tile N (and L with a 1-element halo) + two-phase stats
        # reduction (also re-enables a "parallel" axis for v7x megacore).
        raise NotImplementedError("input too large for the fused single-step kernel")

    flops = 2 * (2 * n * cout * 3 * cout * l) + 14 * n * cout * l
    bytes_accessed = (n * cin * l * x_bytes + n * cout * l * x_bytes
                      + (w1s.size + w2s.size) * jnp.dtype(_MM_DTYPE).itemsize
                      + 4 * cout * 4)

    return pl.pallas_call(
        _fused_residual_kernel,
        grid=(1,),
        in_specs=[_full_spec((n, cin, l)), _full_spec(w1s.shape), _full_spec(w2s.shape),
                  _full_spec((cout, 1)), _full_spec((cout, 1)),
                  _full_spec((cout, 1)), _full_spec((cout, 1))],
        out_specs=_full_spec((n, cout, l)),
        out_shape=jax.ShapeDtypeStruct((n, cout, l), x_ncl.dtype),
        scratch_shapes=[pltpu.VMEM((n, cout, l), jnp.float32),   # y1
                        pltpu.VMEM((n, cout, l), jnp.float32)],  # y2
        compiler_params=pltpu.CompilerParams(
            dimension_semantics=("arbitrary",),
            vmem_limit_bytes=int(max(vmem_needed + (4 << 20), 16 << 20)),
        ),
        cost_estimate=pl.CostEstimate(flops=int(flops),
                                      transcendentals=int(2 * n * cout * l),
                                      bytes_accessed=int(bytes_accessed)),
    )(x_ncl, w1s, w2s, g1, b1, g2, b2)


# --------------------------- pure-JAX reference -------------------------------

def residual_reference(x, p):
    """Pure-JAX reference in PyTorch NCL layout (includes the conv biases)."""
    def conv(xi, w, b):
        y = lax.conv_general_dilated(xi, w, window_strides=(1,), padding=[(1, 1)],
                                     dimension_numbers=("NCH", "OIH", "NCH"))
        return y + b[None, :, None]

    def bn(y, g, be):
        mu = jnp.mean(y, axis=(0, 2), keepdims=True)
        var = jnp.mean(jnp.square(y - mu), axis=(0, 2), keepdims=True)
        return (y - mu) * lax.rsqrt(var + _EPS) * g[None, :, None] + be[None, :, None]

    y = _elu(bn(conv(x, p["w1"], p["b1"]), p["gamma1"], p["beta1"]))
    y = bn(conv(y, p["w2"], p["b2"]), p["gamma2"], p["beta2"])
    return _elu(x + y)


if __name__ == "__main__":
    key = jax.random.PRNGKey(0)
    keys = jax.random.split(key, 8)
    N, C, L = 2, 8, 128  # in_channels == out_channels == 8, L on the lane axis

    x = jax.random.normal(keys[0], (N, C, L), jnp.float32)
    params = {
        # PyTorch Conv1d weight layout: (Cout, Cin, K)
        "w1": 0.2 * jax.random.normal(keys[1], (C, C, 3), jnp.float32),
        "b1": 0.1 * jax.random.normal(keys[2], (C,), jnp.float32),
        "w2": 0.2 * jax.random.normal(keys[3], (C, C, 3), jnp.float32),
        "b2": 0.1 * jax.random.normal(keys[4], (C,), jnp.float32),
        # BatchNorm1d affine params (non-trivial to exercise the math)
        "gamma1": 1.0 + 0.1 * jax.random.normal(keys[5], (C,), jnp.float32),
        "beta1": 0.1 * jax.random.normal(keys[6], (C,), jnp.float32),
        "gamma2": 1.0 + 0.1 * jax.random.normal(keys[7], (C,), jnp.float32),
        "beta2": jnp.zeros((C,), jnp.float32),
    }

    out = jax.block_until_ready(residual_forward(x, params))
    ref = residual_reference(x, params)
    assert out.shape == (N, C, L)
    assert jnp.allclose(out, ref, atol=1e-3, rtol=1e-3), "mismatch vs JAX reference"
    print("KERNEL_OK")
</pallas_src>

<mosaic_0001>
module attributes {stable_mosaic.version = 11 : i64} {
  func.func @_fused_residual_kernel(%arg0: i32, %arg1: memref<2x8x128xf32, #tpu.memory_space<vmem>>, %arg2: memref<8x24xf32, #tpu.memory_space<vmem>>, %arg3: memref<8x24xf32, #tpu.memory_space<vmem>>, %arg4: memref<8x1xf32, #tpu.memory_space<vmem>>, %arg5: memref<8x1xf32, #tpu.memory_space<vmem>>, %arg6: memref<8x1xf32, #tpu.memory_space<vmem>>, %arg7: memref<8x1xf32, #tpu.memory_space<vmem>>, %arg8: memref<2x8x128xf32, #tpu.memory_space<vmem>>, %arg9: memref<2x8x128xf32, #tpu.memory_space<vmem>>, %arg10: memref<2x8x128xf32, #tpu.memory_space<vmem>>) attributes {dimension_semantics = [#tpu.dimension_semantics<arbitrary>], iteration_bounds = array<i64: 1>, scalar_prefetch = 0 : i64, scratch_operands = 2 : i64, tpu.core_type = #tpu.core_type<tc>, window_params = [{pipeline_mode = #tpu.pipeline_mode<synchronous>, transform_indices = @transform_0, window_bounds = array<i64: 2, 8, 128>}, {pipeline_mode = #tpu.pipeline_mode<synchronous>, transform_indices = @transform_1, window_bounds = array<i64: 8, 24>}, {pipeline_mode = #tpu.pipeline_mode<synchronous>, transform_indices = @transform_2, window_bounds = array<i64: 8, 24>}, {pipeline_mode = #tpu.pipeline_mode<synchronous>, transform_indices = @transform_3, window_bounds = array<i64: 8, 1>}, {pipeline_mode = #tpu.pipeline_mode<synchronous>, transform_indices = @transform_4, window_bounds = array<i64: 8, 1>}, {pipeline_mode = #tpu.pipeline_mode<synchronous>, transform_indices = @transform_5, window_bounds = array<i64: 8, 1>}, {pipeline_mode = #tpu.pipeline_mode<synchronous>, transform_indices = @transform_6, window_bounds = array<i64: 8, 1>}, {pipeline_mode = #tpu.pipeline_mode<synchronous>, transform_indices = @transform_7, window_bounds = array<i64: 2, 8, 128>}]} {
    %c0 = arith.constant 0 : index
    %c0_0 = arith.constant 0 : index
    %0 = vector.load %arg2[%c0, %c0_0] : memref<8x24xf32, #tpu.memory_space<vmem>>, vector<8x24xf32>
    %c0_1 = arith.constant 0 : index
    %c0_2 = arith.constant 0 : index
    %1 = vector.load %arg3[%c0_1, %c0_2] : memref<8x24xf32, #tpu.memory_space<vmem>>, vector<8x24xf32>
    %cst = arith.constant 0.000000e+00 : f32
    %2 = vector.broadcast %cst : f32 to vector<8x1xf32>
    %c0_3 = arith.constant 0 : index
    %c0_4 = arith.constant 0 : index
    %c0_5 = arith.constant 0 : index
    %3 = vector.load %arg1[%c0_3, %c0_4, %c0_5] : memref<2x8x128xf32, #tpu.memory_space<vmem>>, vector<1x8x128xf32>
    %4 = vector.shape_cast %3 : vector<1x8x128xf32> to vector<8x128xf32>
    %5 = tpu.iota {dimensions = array<i32: 1>} : vector<8x128xi32>
    %c0_i32 = arith.constant 0 : i32
    %6 = vector.broadcast %c0_i32 : i32 to vector<8x128xi32>
    %7 = arith.cmpi eq, %5, %6 : vector<8x128xi32>
    %c1_i32 = arith.constant 1 : i32
    %8 = tpu.dynamic_rotate %4 by %c1_i32 dim 1 : vector<8x128xf32>, i32 -> vector<8x128xf32>
    %cst_6 = arith.constant 0.000000e+00 : f32
    %9 = vector.broadcast %cst_6 : f32 to vector<8x128xf32>
    %10 = arith.select %7, %9, %8 : vector<8x128xi1>, vector<8x128xf32>
    %c127_i32 = arith.constant 127 : i32
    %11 = vector.broadcast %c127_i32 : i32 to vector<8x128xi32>
    %12 = arith.cmpi eq, %5, %11 : vector<8x128xi32>
    %c127_i32_7 = arith.constant 127 : i32
    %13 = tpu.dynamic_rotate %4 by %c127_i32_7 dim 1 : vector<8x128xf32>, i32 -> vector<8x128xf32>
    %cst_8 = arith.constant 0.000000e+00 : f32
    %14 = vector.broadcast %cst_8 : f32 to vector<8x128xf32>
    %15 = arith.select %12, %14, %13 : vector<8x128xi1>, vector<8x128xf32>
    %16 = tpu.concatenate %10, %4, %15 in 0 : vector<8x128xf32>, vector<8x128xf32>, vector<8x128xf32> -> vector<24x128xf32>
    %cst_9 = arith.constant dense<0.000000e+00> : vector<8x128xf32>
    %17 = tpu.matmul %0, %16, %cst_9 {dimension_numbers = #tpu.dot_dimension_numbers<[1], [0], [0], [1], [0, 0, 1, 1], [], []>} : vector<8x24xf32>, vector<24x128xf32>, vector<8x128xf32> -> vector<8x128xf32>
    %c0_10 = arith.constant 0 : index
    %c0_11 = arith.constant 0 : index
    %c0_12 = arith.constant 0 : index
    %18 = vector.load %arg9[%c0_10, %c0_11, %c0_12] : memref<2x8x128xf32, #tpu.memory_space<vmem>>, vector<1x8x128xf32>
    %19 = vector.shape_cast %18 : vector<1x8x128xf32> to vector<8x128xf32>
    %20 = vector.shape_cast %17 : vector<8x128xf32> to vector<1x8x128xf32>
    tpu.vector_store %arg9[%c0_10, %c0_11, %c0_12], %20 {strides = array<i32>} : memref<2x8x128xf32, #tpu.memory_space<vmem>>, vector<1x8x128xf32>,
    %cst_13 = arith.constant dense<0.000000e+00> : vector<8xf32>
    %21 = vector.multi_reduction <add>, %17, %cst_13 [1] : vector<8x128xf32> to vector<8xf32>
    %22 = vector.shape_cast %21 : vector<8xf32> to vector<8x1xf32>
    %23 = arith.addf %2, %22 : vector<8x1xf32>
    %c1 = arith.constant 1 : index
    %c0_14 = arith.constant 0 : index
    %c0_15 = arith.constant 0 : index
    %24 = vector.load %arg1[%c1, %c0_14, %c0_15] : memref<2x8x128xf32, #tpu.memory_space<vmem>>, vector<1x8x128xf32>
    %25 = vector.shape_cast %24 : vector<1x8x128xf32> to vector<8x128xf32>
    %26 = tpu.iota {dimensions = array<i32: 1>} : vector<8x128xi32>
    %c0_i32_16 = arith.constant 0 : i32
    %27 = vector.broadcast %c0_i32_16 : i32 to vector<8x128xi32>
    %28 = arith.cmpi eq, %26, %27 : vector<8x128xi32>
    %c1_i32_17 = arith.constant 1 : i32
    %29 = tpu.dynamic_rotate %25 by %c1_i32_17 dim 1 : vector<8x128xf32>, i32 -> vector<8x128xf32>
    %cst_18 = arith.constant 0.000000e+00 : f32
    %30 = vector.broadcast %cst_18 : f32 to vector<8x128xf32>
    %31 = arith.select %28, %30, %29 : vector<8x128xi1>, vector<8x128xf32>
    %c127_i32_19 = arith.constant 127 : i32
    %32 = vector.broadcast %c127_i32_19 : i32 to vector<8x128xi32>
    %33 = arith.cmpi eq, %26, %32 : vector<8x128xi32>
    %c127_i32_20 = arith.constant 127 : i32
    %34 = tpu.dynamic_rotate %25 by %c127_i32_20 dim 1 : vector<8x128xf32>, i32 -> vector<8x128xf32>
    %cst_21 = arith.constant 0.000000e+00 : f32
    %35 = vector.broadcast %cst_21 : f32 to vector<8x128xf32>
    %36 = arith.select %33, %35, %34 : vector<8x128xi1>, vector<8x128xf32>
    %37 = tpu.concatenate %31, %25, %36 in 0 : vector<8x128xf32>, vector<8x128xf32>, vector<8x128xf32> -> vector<24x128xf32>
    %cst_22 = arith.constant dense<0.000000e+00> : vector<8x128xf32>
    %38 = tpu.matmul %0, %37, %cst_22 {dimension_numbers = #tpu.dot_dimension_numbers<[1], [0], [0], [1], [0, 0, 1, 1], [], []>} : vector<8x24xf32>, vector<24x128xf32>, vector<8x128xf32> -> vector<8x128xf32>
    %c1_23 = arith.constant 1 : index
    %c0_24 = arith.constant 0 : index
    %c0_25 = arith.constant 0 : index
    %39 = vector.load %arg9[%c1_23, %c0_24, %c0_25] : memref<2x8x128xf32, #tpu.memory_space<vmem>>, vector<1x8x128xf32>
    %40 = vector.shape_cast %39 : vector<1x8x128xf32> to vector<8x128xf32>
    %41 = vector.shape_cast %38 : vector<8x128xf32> to vector<1x8x128xf32>
    tpu.vector_store %arg9[%c1_23, %c0_24, %c0_25], %41 {strides = array<i32>} : memref<2x8x128xf32, #tpu.memory_space<vmem>>, vector<1x8x128xf32>,
    %cst_26 = arith.constant dense<0.000000e+00> : vector<8xf32>
    %42 = vector.multi_reduction <add>, %38, %cst_26 [1] : vector<8x128xf32> to vector<8xf32>
    %43 = vector.shape_cast %42 : vector<8xf32> to vector<8x1xf32>
    %44 = arith.addf %23, %43 : vector<8x1xf32>
    %cst_27 = arith.constant 3.906250e-03 : f32
    %45 = vector.broadcast %cst_27 : f32 to vector<8x1xf32>
    %46 = arith.mulf %44, %45 : vector<8x1xf32>
    %cst_28 = arith.constant 0.000000e+00 : f32
    %47 = vector.broadcast %cst_28 : f32 to vector<8x1xf32>
    %c0_29 = arith.constant 0 : index
    %c0_30 = arith.constant 0 : index
    %c0_31 = arith.constant 0 : index
    %48 = vector.load %arg9[%c0_29, %c0_30, %c0_31] : memref<2x8x128xf32, #tpu.memory_space<vmem>>, vector<1x8x128xf32>
    %49 = vector.shape_cast %48 : vector<1x8x128xf32> to vector<8x128xf32>
    %50 = vector.broadcast %46 : vector<8x1xf32> to vector<8x128xf32>
    %51 = arith.subf %49, %50 : vector<8x128xf32>
    %52 = arith.mulf %51, %51 : vector<8x128xf32>
    %cst_32 = arith.constant dense<0.000000e+00> : vector<8xf32>
    %53 = vector.multi_reduction <add>, %52, %cst_32 [1] : vector<8x128xf32> to vector<8xf32>
    %54 = vector.shape_cast %53 : vector<8xf32> to vector<8x1xf32>
    %55 = arith.addf %47, %54 : vector<8x1xf32>
    %c1_33 = arith.constant 1 : index
    %c0_34 = arith.constant 0 : index
    %c0_35 = arith.constant 0 : index
    %56 = vector.load %arg9[%c1_33, %c0_34, %c0_35] : memref<2x8x128xf32, #tpu.memory_space<vmem>>, vector<1x8x128xf32>
    %57 = vector.shape_cast %56 : vector<1x8x128xf32> to vector<8x128xf32>
    %58 = vector.broadcast %46 : vector<8x1xf32> to vector<8x128xf32>
    %59 = arith.subf %57, %58 : vector<8x128xf32>
    %60 = arith.mulf %59, %59 : vector<8x128xf32>
    %cst_36 = arith.constant dense<0.000000e+00> : vector<8xf32>
    %61 = vector.multi_reduction <add>, %60, %cst_36 [1] : vector<8x128xf32> to vector<8xf32>
    %62 = vector.shape_cast %61 : vector<8xf32> to vector<8x1xf32>
    %63 = arith.addf %55, %62 : vector<8x1xf32>
    %cst_37 = arith.constant 3.906250e-03 : f32
    %64 = vector.broadcast %cst_37 : f32 to vector<8x1xf32>
    %65 = arith.mulf %63, %64 : vector<8x1xf32>
    %cst_38 = arith.constant 9.99999974E-6 : f32
    %66 = vector.broadcast %cst_38 : f32 to vector<8x1xf32>
    %67 = arith.addf %65, %66 : vector<8x1xf32>
    %68 = math.rsqrt %67 : vector<8x1xf32>
    %c0_39 = arith.constant 0 : index
    %c0_40 = arith.constant 0 : index
    %69 = vector.load %arg4[%c0_39, %c0_40] : memref<8x1xf32, #tpu.memory_space<vmem>>, vector<8x1xf32>
    %70 = arith.mulf %69, %68 : vector<8x1xf32>
    %c0_41 = arith.constant 0 : index
    %c0_42 = arith.constant 0 : index
    %71 = vector.load %arg5[%c0_41, %c0_42] : memref<8x1xf32, #tpu.memory_space<vmem>>, vector<8x1xf32>
    %72 = arith.mulf %46, %70 : vector<8x1xf32>
    %73 = arith.subf %71, %72 : vector<8x1xf32>
    %cst_43 = arith.constant 0.000000e+00 : f32
    %74 = vector.broadcast %cst_43 : f32 to vector<8x1xf32>
    %c0_44 = arith.constant 0 : index
    %c0_45 = arith.constant 0 : index
    %c0_46 = arith.constant 0 : index
    %75 = vector.load %arg9[%c0_44, %c0_45, %c0_46] : memref<2x8x128xf32, #tpu.memory_space<vmem>>, vector<1x8x128xf32>
    %76 = vector.shape_cast %75 : vector<1x8x128xf32> to vector<8x128xf32>
    %77 = vector.broadcast %70 : vector<8x1xf32> to vector<8x128xf32>
    %78 = arith.mulf %76, %77 : vector<8x128xf32>
    %79 = vector.broadcast %73 : vector<8x1xf32> to vector<8x128xf32>
    %80 = arith.addf %78, %79 : vector<8x128xf32>
    %cst_47 = arith.constant 0.000000e+00 : f32
    %81 = vector.broadcast %cst_47 : f32 to vector<8x128xf32>
    %82 = arith.cmpf ogt, %80, %81 : vector<8x128xf32>
    %cst_48 = arith.constant 0.000000e+00 : f32
    %83 = vector.broadcast %cst_48 : f32 to vector<8x128xf32>
    %84 = arith.minimumf %80, %83 : vector<8x128xf32>
    %85 = math.exp %84 : vector<8x128xf32>
    %cst_49 = arith.constant 1.000000e+00 : f32
    %86 = vector.broadcast %cst_49 : f32 to vector<8x128xf32>
    %87 = arith.subf %85, %86 : vector<8x128xf32>
    %88 = arith.select %82, %80, %87 : vector<8x128xi1>, vector<8x128xf32>
    %89 = tpu.iota {dimensions = array<i32: 1>} : vector<8x128xi32>
    %c0_i32_50 = arith.constant 0 : i32
    %90 = vector.broadcast %c0_i32_50 : i32 to vector<8x128xi32>
    %91 = arith.cmpi eq, %89, %90 : vector<8x128xi32>
    %c1_i32_51 = arith.constant 1 : i32
    %92 = tpu.dynamic_rotate %88 by %c1_i32_51 dim 1 : vector<8x128xf32>, i32 -> vector<8x128xf32>
    %cst_52 = arith.constant 0.000000e+00 : f32
    %93 = vector.broadcast %cst_52 : f32 to vector<8x128xf32>
    %94 = arith.select %91, %93, %92 : vector<8x128xi1>, vector<8x128xf32>
    %c127_i32_53 = arith.constant 127 : i32
    %95 = vector.broadcast %c127_i32_53 : i32 to vector<8x128xi32>
    %96 = arith.cmpi eq, %89, %95 : vector<8x128xi32>
    %c127_i32_54 = arith.constant 127 : i32
    %97 = tpu.dynamic_rotate %88 by %c127_i32_54 dim 1 : vector<8x128xf32>, i32 -> vector<8x128xf32>
    %cst_55 = arith.constant 0.000000e+00 : f32
    %98 = vector.broadcast %cst_55 : f32 to vector<8x128xf32>
    %99 = arith.select %96, %98, %97 : vector<8x128xi1>, vector<8x128xf32>
    %100 = tpu.concatenate %94, %88, %99 in 0 : vector<8x128xf32>, vector<8x128xf32>, vector<8x128xf32> -> vector<24x128xf32>
    %cst_56 = arith.constant dense<0.000000e+00> : vector<8x128xf32>
    %101 = tpu.matmul %1, %100, %cst_56 {dimension_numbers = #tpu.dot_dimension_numbers<[1], [0], [0], [1], [0, 0, 1, 1], [], []>} : vector<8x24xf32>, vector<24x128xf32>, vector<8x128xf32> -> vector<8x128xf32>
    %c0_57 = arith.constant 0 : index
    %c0_58 = arith.constant 0 : index
    %c0_59 = arith.constant 0 : index
    %102 = vector.load %arg10[%c0_57, %c0_58, %c0_59] : memref<2x8x128xf32, #tpu.memory_space<vmem>>, vector<1x8x128xf32>
    %103 = vector.shape_cast %102 : vector<1x8x128xf32> to vector<8x128xf32>
    %104 = vector.shape_cast %101 : vector<8x128xf32> to vector<1x8x128xf32>
    tpu.vector_store %arg10[%c0_57, %c0_58, %c0_59], %104 {strides = array<i32>} : memref<2x8x128xf32, #tpu.memory_space<vmem>>, vector<1x8x128xf32>,
    %cst_60 = arith.constant dense<0.000000e+00> : vector<8xf32>
    %105 = vector.multi_reduction <add>, %101, %cst_60 [1] : vector<8x128xf32> to vector<8xf32>
    %106 = vector.shape_cast %105 : vector<8xf32> to vector<8x1xf32>
    %107 = arith.addf %74, %106 : vector<8x1xf32>
    %c1_61 = arith.constant 1 : index
    %c0_62 = arith.constant 0 : index
    %c0_63 = arith.constant 0 : index
    %108 = vector.load %arg9[%c1_61, %c0_62, %c0_63] : memref<2x8x128xf32, #tpu.memory_space<vmem>>, vector<1x8x128xf32>
    %109 = vector.shape_cast %108 : vector<1x8x128xf32> to vector<8x128xf32>
    %110 = vector.broadcast %70 : vector<8x1xf32> to vector<8x128xf32>
    %111 = arith.mulf %109, %110 : vector<8x128xf32>
    %112 = vector.broadcast %73 : vector<8x1xf32> to vector<8x128xf32>
    %113 = arith.addf %111, %112 : vector<8x128xf32>
    %cst_64 = arith.constant 0.000000e+00 : f32
    %114 = vector.broadcast %cst_64 : f32 to vector<8x128xf32>
    %115 = arith.cmpf ogt, %113, %114 : vector<8x128xf32>
    %cst_65 = arith.constant 0.000000e+00 : f32
    %116 = vector.broadcast %cst_65 : f32 to vector<8x128xf32>
    %117 = arith.minimumf %113, %116 : vector<8x128xf32>
    %118 = math.exp %117 : vector<8x128xf32>
    %cst_66 = arith.constant 1.000000e+00 : f32
    %119 = vector.broadcast %cst_66 : f32 to vector<8x128xf32>
    %120 = arith.subf %118, %119 : vector<8x128xf32>
    %121 = arith.select %115, %113, %120 : vector<8x128xi1>, vector<8x128xf32>
    %122 = tpu.iota {dimensions = array<i32: 1>} : vector<8x128xi32>
    %c0_i32_67 = arith.constant 0 : i32
    %123 = vector.broadcast %c0_i32_67 : i32 to vector<8x128xi32>
    %124 = arith.cmpi eq, %122, %123 : vector<8x128xi32>
    %c1_i32_68 = arith.constant 1 : i32
    %125 = tpu.dynamic_rotate %121 by %c1_i32_68 dim 1 : vector<8x128xf32>, i32 -> vector<8x128xf32>
    %cst_69 = arith.constant 0.000000e+00 : f32
    %126 = vector.broadcast %cst_69 : f32 to vector<8x128xf32>
    %127 = arith.select %124, %126, %125 : vector<8x128xi1>, vector<8x128xf32>
    %c127_i32_70 = arith.constant 127 : i32
    %128 = vector.broadcast %c127_i32_70 : i32 to vector<8x128xi32>
    %129 = arith.cmpi eq, %122, %128 : vector<8x128xi32>
    %c127_i32_71 = arith.constant 127 : i32
    %130 = tpu.dynamic_rotate %121 by %c127_i32_71 dim 1 : vector<8x128xf32>, i32 -> vector<8x128xf32>
    %cst_72 = arith.constant 0.000000e+00 : f32
    %131 = vector.broadcast %cst_72 : f32 to vector<8x128xf32>
    %132 = arith.select %129, %131, %130 : vector<8x128xi1>, vector<8x128xf32>
    %133 = tpu.concatenate %127, %121, %132 in 0 : vector<8x128xf32>, vector<8x128xf32>, vector<8x128xf32> -> vector<24x128xf32>
    %cst_73 = arith.constant dense<0.000000e+00> : vector<8x128xf32>
    %134 = tpu.matmul %1, %133, %cst_73 {dimension_numbers = #tpu.dot_dimension_numbers<[1], [0], [0], [1], [0, 0, 1, 1], [], []>} : vector<8x24xf32>, vector<24x128xf32>, vector<8x128xf32> -> vector<8x128xf32>
    %c1_74 = arith.constant 1 : index
    %c0_75 = arith.constant 0 : index
    %c0_76 = arith.constant 0 : index
    %135 = vector.load %arg10[%c1_74, %c0_75, %c0_76] : memref<2x8x128xf32, #tpu.memory_space<vmem>>, vector<1x8x128xf32>
    %136 = vector.shape_cast %135 : vector<1x8x128xf32> to vector<8x128xf32>
    %137 = vector.shape_cast %134 : vector<8x128xf32> to vector<1x8x128xf32>
    tpu.vector_store %arg10[%c1_74, %c0_75, %c0_76], %137 {strides = array<i32>} : memref<2x8x128xf32, #tpu.memory_space<vmem>>, vector<1x8x128xf32>,
    %cst_77 = arith.constant dense<0.000000e+00> : vector<8xf32>
    %138 = vector.multi_reduction <add>, %134, %cst_77 [1] : vector<8x128xf32> to vector<8xf32>
    %139 = vector.shape_cast %138 : vector<8xf32> to vector<8x1xf32>
    %140 = arith.addf %107, %139 : vector<8x1xf32>
    %cst_78 = arith.constant 3.906250e-03 : f32
    %141 = vector.broadcast %cst_78 : f32 to vector<8x1xf32>
    %142 = arith.mulf %140, %141 : vector<8x1xf32>
    %cst_79 = arith.constant 0.000000e+00 : f32
    %143 = vector.broadcast %cst_79 : f32 to vector<8x1xf32>
    %c0_80 = arith.constant 0 : index
    %c0_81 = arith.constant 0 : index
    %c0_82 = arith.constant 0 : index
    %144 = vector.load %arg10[%c0_80, %c0_81, %c0_82] : memref<2x8x128xf32, #tpu.memory_space<vmem>>, vector<1x8x128xf32>
    %145 = vector.shape_cast %144 : vector<1x8x128xf32> to vector<8x128xf32>
    %146 = vector.broadcast %142 : vector<8x1xf32> to vector<8x128xf32>
    %147 = arith.subf %145, %146 : vector<8x128xf32>
    %148 = arith.mulf %147, %147 : vector<8x128xf32>
    %cst_83 = arith.constant dense<0.000000e+00> : vector<8xf32>
    %149 = vector.multi_reduction <add>, %148, %cst_83 [1] : vector<8x128xf32> to vector<8xf32>
    %150 = vector.shape_cast %149 : vector<8xf32> to vector<8x1xf32>
    %151 = arith.addf %143, %150 : vector<8x1xf32>
    %c1_84 = arith.constant 1 : index
    %c0_85 = arith.constant 0 : index
    %c0_86 = arith.constant 0 : index
    %152 = vector.load %arg10[%c1_84, %c0_85, %c0_86] : memref<2x8x128xf32, #tpu.memory_space<vmem>>, vector<1x8x128xf32>
    %153 = vector.shape_cast %152 : vector<1x8x128xf32> to vector<8x128xf32>
    %154 = vector.broadcast %142 : vector<8x1xf32> to vector<8x128xf32>
    %155 = arith.subf %153, %154 : vector<8x128xf32>
    %156 = arith.mulf %155, %155 : vector<8x128xf32>
    %cst_87 = arith.constant dense<0.000000e+00> : vector<8xf32>
    %157 = vector.multi_reduction <add>, %156, %cst_87 [1] : vector<8x128xf32> to vector<8xf32>
    %158 = vector.shape_cast %157 : vector<8xf32> to vector<8x1xf32>
    %159 = arith.addf %151, %158 : vector<8x1xf32>
    %cst_88 = arith.constant 3.906250e-03 : f32
    %160 = vector.broadcast %cst_88 : f32 to vector<8x1xf32>
    %161 = arith.mulf %159, %160 : vector<8x1xf32>
    %cst_89 = arith.constant 9.99999974E-6 : f32
    %162 = vector.broadcast %cst_89 : f32 to vector<8x1xf32>
    %163 = arith.addf %161, %162 : vector<8x1xf32>
    %164 = math.rsqrt %163 : vector<8x1xf32>
    %c0_90 = arith.constant 0 : index
    %c0_91 = arith.constant 0 : index
    %165 = vector.load %arg6[%c0_90, %c0_91] : memref<8x1xf32, #tpu.memory_space<vmem>>, vector<8x1xf32>
    %166 = arith.mulf %165, %164 : vector<8x1xf32>
    %c0_92 = arith.constant 0 : index
    %c0_93 = arith.constant 0 : index
    %167 = vector.load %arg7[%c0_92, %c0_93] : memref<8x1xf32, #tpu.memory_space<vmem>>, vector<8x1xf32>
    %168 = arith.mulf %142, %166 : vector<8x1xf32>
    %169 = arith.subf %167, %168 : vector<8x1xf32>
    %c0_94 = arith.constant 0 : index
    %c0_95 = arith.constant 0 : index
    %c0_96 = arith.constant 0 : index
    %170 = vector.load %arg1[%c0_94, %c0_95, %c0_96] : memref<2x8x128xf32, #tpu.memory_space<vmem>>, vector<1x8x128xf32>
    %171 = vector.shape_cast %170 : vector<1x8x128xf32> to vector<8x128xf32>
    %c0_97 = arith.constant 0 : index
    %c0_98 = arith.constant 0 : index
    %c0_99 = arith.constant 0 : index
    %172 = vector.load %arg10[%c0_97, %c0_98, %c0_99] : memref<2x8x128xf32, #tpu.memory_space<vmem>>, vector<1x8x128xf32>
    %173 = vector.shape_cast %172 : vector<1x8x128xf32> to vector<8x128xf32>
    %174 = vector.broadcast %166 : vector<8x1xf32> to vector<8x128xf32>
    %175 = arith.mulf %173, %174 : vector<8x128xf32>
    %176 = arith.addf %171, %175 : vector<8x128xf32>
    %177 = vector.broadcast %169 : vector<8x1xf32> to vector<8x128xf32>
    %178 = arith.addf %176, %177 : vector<8x128xf32>
    %cst_100 = arith.constant 0.000000e+00 : f32
    %179 = vector.broadcast %cst_100 : f32 to vector<8x128xf32>
    %180 = arith.cmpf ogt, %178, %179 : vector<8x128xf32>
    %cst_101 = arith.constant 0.000000e+00 : f32
    %181 = vector.broadcast %cst_101 : f32 to vector<8x128xf32>
    %182 = arith.minimumf %178, %181 : vector<8x128xf32>
    %183 = math.exp %182 : vector<8x128xf32>
    %cst_102 = arith.constant 1.000000e+00 : f32
    %184 = vector.broadcast %cst_102 : f32 to vector<8x128xf32>
    %185 = arith.subf %183, %184 : vector<8x128xf32>
    %186 = arith.select %180, %178, %185 : vector<8x128xi1>, vector<8x128xf32>
    %c0_103 = arith.constant 0 : index
    %c0_104 = arith.constant 0 : index
    %c0_105 = arith.constant 0 : index
    %187 = vector.load %arg8[%c0_103, %c0_104, %c0_105] : memref<2x8x128xf32, #tpu.memory_space<vmem>>, vector<1x8x128xf32>
    %188 = vector.shape_cast %187 : vector<1x8x128xf32> to vector<8x128xf32>
    %189 = vector.shape_cast %186 : vector<8x128xf32> to vector<1x8x128xf32>
    tpu.vector_store %arg8[%c0_103, %c0_104, %c0_105], %189 {strides = array<i32>} : memref<2x8x128xf32, #tpu.memory_space<vmem>>, vector<1x8x128xf32>,
    %c1_106 = arith.constant 1 : index
    %c0_107 = arith.constant 0 : index
    %c0_108 = arith.constant 0 : index
    %190 = vector.load %arg1[%c1_106, %c0_107, %c0_108] : memref<2x8x128xf32, #tpu.memory_space<vmem>>, vector<1x8x128xf32>
    %191 = vector.shape_cast %190 : vector<1x8x128xf32> to vector<8x128xf32>
    %c1_109 = arith.constant 1 : index
    %c0_110 = arith.constant 0 : index
    %c0_111 = arith.constant 0 : index
    %192 = vector.load %arg10[%c1_109, %c0_110, %c0_111] : memref<2x8x128xf32, #tpu.memory_space<vmem>>, vector<1x8x128xf32>
    %193 = vector.shape_cast %192 : vector<1x8x128xf32> to vector<8x128xf32>
    %194 = vector.broadcast %166 : vector<8x1xf32> to vector<8x128xf32>
    %195 = arith.mulf %193, %194 : vector<8x128xf32>
    %196 = arith.addf %191, %195 : vector<8x128xf32>
    %197 = vector.broadcast %169 : vector<8x1xf32> to vector<8x128xf32>
    %198 = arith.addf %196, %197 : vector<8x128xf32>
    %cst_112 = arith.constant 0.000000e+00 : f32
    %199 = vector.broadcast %cst_112 : f32 to vector<8x128xf32>
    %200 = arith.cmpf ogt, %198, %199 : vector<8x128xf32>
    %cst_113 = arith.constant 0.000000e+00 : f32
    %201 = vector.broadcast %cst_113 : f32 to vector<8x128xf32>
    %202 = arith.minimumf %198, %201 : vector<8x128xf32>
    %203 = math.exp %202 : vector<8x128xf32>
    %cst_114 = arith.constant 1.000000e+00 : f32
    %204 = vector.broadcast %cst_114 : f32 to vector<8x128xf32>
    %205 = arith.subf %203, %204 : vector<8x128xf32>
    %206 = arith.select %200, %198, %205 : vector<8x128xi1>, vector<8x128xf32>
    %c1_115 = arith.constant 1 : index
    %c0_116 = arith.constant 0 : index
    %c0_117 = arith.constant 0 : index
    %207 = vector.load %arg8[%c1_115, %c0_116, %c0_117] : memref<2x8x128xf32, #tpu.memory_space<vmem>>, vector<1x8x128xf32>
    %208 = vector.shape_cast %207 : vector<1x8x128xf32> to vector<8x128xf32>
    %209 = vector.shape_cast %206 : vector<8x128xf32> to vector<1x8x128xf32>
    tpu.vector_store %arg8[%c1_115, %c0_116, %c0_117], %209 {strides = array<i32>} : memref<2x8x128xf32, #tpu.memory_space<vmem>>, vector<1x8x128xf32>,
    return
  }
  func.func @transform_0(%arg0: i32) -> (i32, i32, i32) {
    %c0_i32 = arith.constant 0 : i32
    %c0_i32_0 = arith.constant 0 : i32
    %c0_i32_1 = arith.constant 0 : i32
    %c0_i32_2 = arith.constant 0 : i32
    return %c0_i32, %c0_i32_0, %c0_i32_1 : i32, i32, i32
  }
  func.func @transform_1(%arg0: i32) -> (i32, i32) {
    %c0_i32 = arith.constant 0 : i32
    %c0_i32_0 = arith.constant 0 : i32
    %c0_i32_1 = arith.constant 0 : i32
    return %c0_i32, %c0_i32_0 : i32, i32
  }
  func.func @transform_2(%arg0: i32) -> (i32, i32) {
    %c0_i32 = arith.constant 0 : i32
    %c0_i32_0 = arith.constant 0 : i32
    %c0_i32_1 = arith.constant 0 : i32
    return %c0_i32, %c0_i32_0 : i32, i32
  }
  func.func @transform_3(%arg0: i32) -> (i32, i32) {
    %c0_i32 = arith.constant 0 : i32
    %c0_i32_0 = arith.constant 0 : i32
    %c0_i32_1 = arith.constant 0 : i32
    return %c0_i32, %c0_i32_0 : i32, i32
  }
  func.func @transform_4(%arg0: i32) -> (i32, i32) {
    %c0_i32 = arith.constant 0 : i32
    %c0_i32_0 = arith.constant 0 : i32
    %c0_i32_1 = arith.constant 0 : i32
    return %c0_i32, %c0_i32_0 : i32, i32
  }
  func.func @transform_5(%arg0: i32) -> (i32, i32) {
    %c0_i32 = arith.constant 0 : i32
    %c0_i32_0 = arith.constant 0 : i32
    %c0_i32_1 = arith.constant 0 : i32
    return %c0_i32, %c0_i32_0 : i32, i32
  }
  func.func @transform_6(%arg0: i32) -> (i32, i32) {
    %c0_i32 = arith.constant 0 : i32
    %c0_i32_0 = arith.constant 0 : i32
    %c0_i32_1 = arith.constant 0 : i32
    return %c0_i32, %c0_i32_0 : i32, i32
  }
  func.func @transform_7(%arg0: i32) -> (i32, i32, i32) {
    %c0_i32 = arith.constant 0 : i32
    %c0_i32_0 = arith.constant 0 : i32
    %c0_i32_1 = arith.constant 0 : i32
    %c0_i32_2 = arith.constant 0 : i32
    return %c0_i32, %c0_i32_0, %c0_i32_1 : i32, i32, i32
  }
}

</mosaic_0001>

<llo_original>
// kernel: tpu_custom_call.1
$region0: #{tpu_custom_call.1}
  #allocation0 [shape = 'u32[]', space=smem, size = 0x4, offset = 0x4, fixed_abs, tag = 'smem constant byte address 0x4 - core index']
  #allocation1 [shape = 'u32[144,128]{1,0:T(1,128)}', space=vmem, size = 0x12000, scoped, tag = 'internal scratch']
  #allocation2 [shape = 'f32[2,8,128]{2,1,0:T(8,128)}', space=vmem, size = 0x2000, scoped, tag = 'scratch operand']
  #allocation3 [shape = 'f32[2,8,128]{2,1,0:T(8,128)}', space=vmem, size = 0x2000, scoped, tag = 'scratch operand']
  %s0 = inlined_call_operand.vmem [shape: f32[2,8,128], index: 0, kind: input, shape index: {}]
  %s1 = inlined_call_operand.vmem [shape: f32[8,24], index: 1, kind: input, shape index: {}]
  %s2 = inlined_call_operand.vmem [shape: f32[8,24], index: 2, kind: input, shape index: {}]
  %s3 = inlined_call_operand.vmem [shape: f32[8,1], index: 3, kind: input, shape index: {}]
  %s4 = inlined_call_operand.vmem [shape: f32[8,1], index: 4, kind: input, shape index: {}]
  %s5 = inlined_call_operand.vmem [shape: f32[8,1], index: 5, kind: input, shape index: {}]
  %s6 = inlined_call_operand.vmem [shape: f32[8,1], index: 6, kind: input, shape index: {}]
  %s7 = inlined_call_operand.hbm [shape: f32[2,8,128], index: 7, kind: output, shape index: {}]
  %s8 = sld [smem:[#allocation0]]
  $region38: #{tpu_custom_call.1} parent=0
    _
  %s10 = ssub.s32 1, %s8
  %s11 = scalar_select 0, %s10, %s8
  $region1: #{tpu_custom_call.1} parent=0
    #allocation4 [shape = 'u8[8192]{0}', space=vmem, size = 0x2000, scoped, tag = 'output window, operand 0, single buffered']
    #allocation5 [shape = 's32[1]{0}', space=sflag, size = 0x4, scoped, tag = 'scoped memory for tpu_custom_call.1']
    %12 = vsyncpa [#allocation5], 0
    // Predicated region
    $region2: #{tpu_custom_call.1} parent=1 // pred_check
      _
    $region3: #{tpu_custom_call.1} parent=1 // pred_check_branch
      %14 = sbr.rel (0) target = $region5
    $region4: #{tpu_custom_call.1} parent=1 // pred_region
      _
    $region5: #{tpu_custom_call.1} parent=1 // pred_fallthru
      _
    // Predicated region
    $region6: #{tpu_custom_call.1} parent=1 // pred_check
      _
    $region7: #{tpu_custom_call.1} parent=1 // pred_check_branch
      %16 = sbr.rel (0) target = $region9
    $region8: #{tpu_custom_call.1} parent=1 // pred_region
      _
    $region9: #{tpu_custom_call.1} parent=1 // pred_fallthru
      _
    // Predicated region
    $region10: #{tpu_custom_call.1} parent=1 // pred_check
      _
    $region11: #{tpu_custom_call.1} parent=1 // pred_check_branch
      %18 = sbr.rel (0) target = $region13
    $region12: #{tpu_custom_call.1} parent=1 // pred_region
      _
    $region13: #{tpu_custom_call.1} parent=1 // pred_fallthru
      _
    // Predicated region
    $region14: #{tpu_custom_call.1} parent=1 // pred_check
      _
    $region15: #{tpu_custom_call.1} parent=1 // pred_check_branch
      %20 = sbr.rel (0) target = $region17
    $region16: #{tpu_custom_call.1} parent=1 // pred_region
      _
    $region17: #{tpu_custom_call.1} parent=1 // pred_fallthru
      _
    // Predicated region
    $region18: #{tpu_custom_call.1} parent=1 // pred_check
      _
    $region19: #{tpu_custom_call.1} parent=1 // pred_check_branch
      %22 = sbr.rel (0) target = $region21
    $region20: #{tpu_custom_call.1} parent=1 // pred_region
      _
    $region21: #{tpu_custom_call.1} parent=1 // pred_fallthru
      _
    // Predicated region
    $region22: #{tpu_custom_call.1} parent=1 // pred_check
      _
    $region23: #{tpu_custom_call.1} parent=1 // pred_check_branch
      %24 = sbr.rel (0) target = $region25
    $region24: #{tpu_custom_call.1} parent=1 // pred_region
      _
    $region25: #{tpu_custom_call.1} parent=1 // pred_fallthru
      _
    // Predicated region
    $region26: #{tpu_custom_call.1} parent=1 // pred_check
      _
    $region27: #{tpu_custom_call.1} parent=1 // pred_check_branch
      %26 = sbr.rel (0) target = $region29
    $region28: #{tpu_custom_call.1} parent=1 // pred_region
      _
    $region29: #{tpu_custom_call.1} parent=1 // pred_fallthru
      _
    %v27 = vld [vmem:[%s1] sm:$0xff]
    %v28 = vld [vmem:[%s2] sm:$0xff]
    %v29 = vld [vmem:[%s0] sm:$0xff]
    %v30 = vlaneseq
    %v31 = vand.u32 %v30, 127
    %vm32 = vcmp.eq.s32.totalorder %v31, 0
    %33 = vrot.lane.b32.xlu0 %v29, 1
    %v34 = vpop.permute.xlu0 %33
    %v35 = vsel %vm32, 0.0, %v34
    %vm36 = vcmp.eq.s32.totalorder %v31, 127
    %37 = vrot.lane.b32.xlu0 %v29, 127
    %v38 = vpop.permute.xlu0 %37
    %v39 = vsel %vm36, 0.0, %v38
    %vm40 = vcmask 195584
    %v42 = vsel %vm40, %v27, 0
    %44 = vmatprep.subr.mxu0 0.0
    %45 = vmatpush1.msra.mxu0 %v35
    %46 = vmatprep.subr.mxu0 0.0
    %47 = vmatpush1.msra.mxu0 %v29
    %48 = vmatprep.subr.mxu0 0.0
    %49 = vmatpush1.msra.mxu0 %v39
    %50 = vmatprep.subr.mxu0 0.0
    %51 = vmatpush1.msra.mxu0 0.0
    %52 = vmatprep.subr.mxu0 0.0
    %53 = vmatpush1.msra.mxu0 0.0
    %54 = vmatprep.subr.mxu0 0.0
    %55 = vmatpush1.msra.mxu0 0.0
    %56 = vmatprep.subr.mxu0 0.0
    %57 = vmatpush1.msra.mxu0 0.0
    %58 = vmatprep.subr.mxu0 0.0
    %59 = vmatpush1.msra.mxu0 0.0
    %60 = vmatprep.subr.mxu0 0.0
    %61 = vmatpush1.msra.mxu0 0.0
    %62 = vmatprep.subr.mxu0 0.0
    %63 = vmatpush1.msra.mxu0 0.0
    %64 = vmatprep.subr.mxu0 0.0
    %65 = vmatpush1.msra.mxu0 0.0
    %66 = vmatprep.subr.mxu0 0.0
    %67 = vmatpush1.msra.mxu0 0.0
    %68 = vmatprep.subr.mxu0 0.0
    %69 = vmatpush1.msra.mxu0 0.0
    %70 = vmatprep.subr.mxu0 0.0
    %71 = vmatpush1.msra.mxu0 0.0
    %72 = vmatprep.subr.mxu0 0.0
    %73 = vmatpush1.msra.mxu0 0.0
    %74 = vmatprep.subr.mxu0 0.0
    %75 = vmatpush1.msra.mxu0 0.0
    %76 = vmatprep.subr.mxu0 0.0
    %77 = vmatpush1.msra.mxu0 0.0
    %78 = vmatprep.subr.mxu0 0.0
    %79 = vmatpush1.msra.mxu0 0.0
    %80 = vmatprep.subr.mxu0 0.0
    %81 = vmatpush1.msra.mxu0 0.0
    %82 = vmatprep.subr.mxu0 0.0
    %83 = vmatpush1.msra.mxu0 0.0
    %84 = vmatprep.subr.mxu0 0.0
    %85 = vmatpush1.msra.mxu0 0.0
    %86 = vmatprep.subr.mxu0 0.0
    %87 = vmatpush1.msra.mxu0 0.0
    %88 = vmatprep.subr.mxu0 0.0
    %89 = vmatpush1.msra.mxu0 0.0
    %90 = vmatprep.subr.mxu0 0.0
    %91 = vmatpush1.msra.mxu0 0.0
    %92 = vmatprep.subr.mxu0 0.0
    %93 = vmatpush1.msra.mxu0 0.0
    %94 = vmatprep.subr.mxu0 0.0
    %95 = vmatpush1.msra.mxu0 0.0
    %96 = vmatprep.subr.mxu0 0.0
    %97 = vmatpush1.msra.mxu0 0.0
    %98 = vmatprep.subr.mxu0 0.0
    %99 = vmatpush1.msra.mxu0 0.0
    %100 = vmatprep.subr.mxu0 0.0
    %101 = vmatpush1.msra.mxu0 0.0
    %102 = vmatprep.subr.mxu0 0.0
    %103 = vmatpush1.msra.mxu0 0.0
    %104 = vmatprep.subr.mxu0 0.0
    %105 = vmatpush1.msra.mxu0 0.0
    %106 = vmatprep.subr.mxu0 0.0
    %107 = vmatpush1.msra.mxu0 0.0
    %108 = vmatprep.mubr.f32.mxu0 0.0
    %109 = vmatmul.mubr.f32.gmra.mrb[0].mxu0 %v42
    %v110 = vpop.f32.mrb[0].mxu0
    %v111 = vadd.f32 0.0, %v110
    %v112 = vpop.f32.mrb[0].mxu0
    %113 = vdwg.mxu0
    %114 = vst [vmem:[#allocation2] sm:$0xff] %v111
    %115 = vadd.xlane.f32.xlu0 %v111
    %v116 = vpop.xlane.xlu0 %115
    %v117 = vadd.f32 %v116, 0.0
    %s118 = scalar_lea.vmem %s0, 8
    %v119 = vld [vmem:[%s118] sm:$0xff]
    %120 = vrot.lane.b32.xlu0 %v119, 1
    %v121 = vpop.permute.xlu0 %120
    %v122 = vsel %vm32, 0.0, %v121
    %123 = vrot.lane.b32.xlu0 %v119, 127
    %v124 = vpop.permute.xlu0 %123
    %v125 = vsel %vm36, 0.0, %v124
    %126 = vmatprep.subr.mxu0 0.0
    %127 = vmatpush1.msra.mxu0 %v122
    %128 = vmatprep.subr.mxu0 0.0
    %129 = vmatpush1.msra.mxu0 %v119
    %130 = vmatprep.subr.mxu0 0.0
    %131 = vmatpush1.msra.mxu0 %v125
    %132 = vmatprep.subr.mxu0 0.0
    %133 = vmatpush1.msra.mxu0 0.0
    %134 = vmatprep.subr.mxu0 0.0
    %135 = vmatpush1.msra.mxu0 0.0
    %136 = vmatprep.subr.mxu0 0.0
    %137 = vmatpush1.msra.mxu0 0.0
    %138 = vmatprep.subr.mxu0 0.0
    %139 = vmatpush1.msra.mxu0 0.0
    %140 = vmatprep.subr.mxu0 0.0
    %141 = vmatpush1.msra.mxu0 0.0
    %142 = vmatprep.subr.mxu0 0.0
    %143 = vmatpush1.msra.mxu0 0.0
    %144 = vmatprep.subr.mxu0 0.0
    %145 = vmatpush1.msra.mxu0 0.0
    %146 = vmatprep.subr.mxu0 0.0
    %147 = vmatpush1.msra.mxu0 0.0
    %148 = vmatprep.subr.mxu0 0.0
    %149 = vmatpush1.msra.mxu0 0.0
    %150 = vmatprep.subr.mxu0 0.0
    %151 = vmatpush1.msra.mxu0 0.0
    %152 = vmatprep.subr.mxu0 0.0
    %153 = vmatpush1.msra.mxu0 0.0
    %154 = vmatprep.subr.mxu0 0.0
    %155 = vmatpush1.msra.mxu0 0.0
    %156 = vmatprep.subr.mxu0 0.0
    %157 = vmatpush1.msra.mxu0 0.0
    %158 = vmatprep.subr.mxu0 0.0
    %159 = vmatpush1.msra.mxu0 0.0
    %160 = vmatprep.subr.mxu0 0.0
    %161 = vmatpush1.msra.mxu0 0.0
    %162 = vmatprep.subr.mxu0 0.0
    %163 = vmatpush1.msra.mxu0 0.0
    %164 = vmatprep.subr.mxu0 0.0
    %165 = vmatpush1.msra.mxu0 0.0
    %166 = vmatprep.subr.mxu0 0.0
    %167 = vmatpush1.msra.mxu0 0.0
    %168 = vmatprep.subr.mxu0 0.0
    %169 = vmatpush1.msra.mxu0 0.0
    %170 = vmatprep.subr.mxu0 0.0
    %171 = vmatpush1.msra.mxu0 0.0
    %172 = vmatprep.subr.mxu0 0.0
    %173 = vmatpush1.msra.mxu0 0.0
    %174 = vmatprep.subr.mxu0 0.0
    %175 = vmatpush1.msra.mxu0 0.0
    %176 = vmatprep.subr.mxu0 0.0
    %177 = vmatpush1.msra.mxu0 0.0
    %178 = vmatprep.subr.mxu0 0.0
    %179 = vmatpush1.msra.mxu0 0.0
    %180 = vmatprep.subr.mxu0 0.0
    %181 = vmatpush1.msra.mxu0 0.0
    %182 = vmatprep.subr.mxu0 0.0
    %183 = vmatpush1.msra.mxu0 0.0
    %184 = vmatprep.subr.mxu0 0.0
    %185 = vmatpush1.msra.mxu0 0.0
    %186 = vmatprep.subr.mxu0 0.0
    %187 = vmatpush1.msra.mxu0 0.0
    %188 = vmatprep.subr.mxu0 0.0
    %189 = vmatpush1.msra.mxu0 0.0
    %190 = vmatprep.mubr.f32.mxu0 0.0
    %191 = vmatmul.mubr.f32.gmra.mrb[0].mxu0 %v42
    %v192 = vpop.f32.mrb[0].mxu0
    %v193 = vadd.f32 0.0, %v192
    %v194 = vpop.f32.mrb[0].mxu0
    %195 = vdwg.mxu0
    %s196 = scalar_lea.vmem [#allocation2], 8
    %197 = vst [vmem:[%s196] sm:$0xff] %v193
    %198 = vadd.xlane.f32.xlu0 %v193
    %v199 = vpop.xlane.xlu0 %198
    %v200 = vadd.f32 %v117, %v199
    %v201 = vmul.f32 %v200, 0.00390625
    %v202 = vld [vmem:[#allocation2] sm:$0xff]
    %v203 = vsub.f32 %v202, %v201
    %v204 = vmul.f32 %v203, %v203
    %205 = vadd.xlane.f32.xlu0 %v204
    %v206 = vpop.xlane.xlu0 %205
    %v207 = vadd.f32 %v206, 0.0
    %v208 = vld [vmem:[%s196] sm:$0xff]
    %v209 = vsub.f32 %v208, %v201
    %v210 = vmul.f32 %v209, %v209
    %211 = vadd.xlane.f32.xlu0 %v210
    %v212 = vpop.xlane.xlu0 %211
    %v213 = vadd.f32 %v207, %v212
    %v214 = vmul.f32 %v213, 0.00390625
    %v215 = vadd.f32 %v214, 1e-05
    %v216 = vrsqrt.pop %v215
    %v217 = vld [vmem:[%s3] sm:$0xff]
    %v218 = vmul.f32 %v217, %v216
    %v219 = vld [vmem:[%s4] sm:$0xff]
    %v220 = vmul.f32 %v201, %v218
    %v221 = vsub.f32 %v219, %v220
    %223 = vset.pattern.permute.xlu0 0
    %224 = vperm.xlu0 %223, %v218
    %v225 = vpop.permute.xlu0 %224
    %v227 = vmul.f32 %v202, %v225
    %229 = vset.pattern.permute.xlu0 0
    %230 = vperm.xlu0 %229, %v221
    %v231 = vpop.permute.xlu0 %230
    %v233 = vadd.f32 %v227, %v231
    %vm234 = vcmp.gt.f32.partialorder %v233, 0.0
    %v235 = vmin.f32 %v233, 0.0
    %v236 = vmul.f32 %v235, 1.442695
    %v237 = vpow.pop %v236
    %v238 = vsub.f32 %v237, 1.0
    %v239 = vsel %vm234, %v233, %v238
    %240 = vrot.lane.b32.xlu0 %v239, 1
    %v241 = vpop.permute.xlu0 %240
    %v242 = vsel %vm32, 0.0, %v241
    %243 = vrot.lane.b32.xlu0 %v239, 127
    %v244 = vpop.permute.xlu0 %243
    %v245 = vsel %vm36, 0.0, %v244
    %v247 = vsel %vm40, %v28, 0
    %249 = vmatprep.subr.mxu0 0.0
    %250 = vmatpush1.msra.mxu0 %v242
    %251 = vmatprep.subr.mxu0 0.0
    %252 = vmatpush1.msra.mxu0 %v239
    %253 = vmatprep.subr.mxu0 0.0
    %254 = vmatpush1.msra.mxu0 %v245
    %255 = vmatprep.subr.mxu0 0.0
    %256 = vmatpush1.msra.mxu0 0.0
    %257 = vmatprep.subr.mxu0 0.0
    %258 = vmatpush1.msra.mxu0 0.0
    %259 = vmatprep.subr.mxu0 0.0
    %260 = vmatpush1.msra.mxu0 0.0
    %261 = vmatprep.subr.mxu0 0.0
    %262 = vmatpush1.msra.mxu0 0.0
    %263 = vmatprep.subr.mxu0 0.0
    %264 = vmatpush1.msra.mxu0 0.0
    %265 = vmatprep.subr.mxu0 0.0
    %266 = vmatpush1.msra.mxu0 0.0
    %267 = vmatprep.subr.mxu0 0.0
    %268 = vmatpush1.msra.mxu0 0.0
    %269 = vmatprep.subr.mxu0 0.0
    %270 = vmatpush1.msra.mxu0 0.0
    %271 = vmatprep.subr.mxu0 0.0
    %272 = vmatpush1.msra.mxu0 0.0
    %273 = vmatprep.subr.mxu0 0.0
    %274 = vmatpush1.msra.mxu0 0.0
    %275 = vmatprep.subr.mxu0 0.0
    %276 = vmatpush1.msra.mxu0 0.0
    %277 = vmatprep.subr.mxu0 0.0
    %278 = vmatpush1.msra.mxu0 0.0
    %279 = vmatprep.subr.mxu0 0.0
    %280 = vmatpush1.msra.mxu0 0.0
    %281 = vmatprep.subr.mxu0 0.0
    %282 = vmatpush1.msra.mxu0 0.0
    %283 = vmatprep.subr.mxu0 0.0
    %284 = vmatpush1.msra.mxu0 0.0
    %285 = vmatprep.subr.mxu0 0.0
    %286 = vmatpush1.msra.mxu0 0.0
    %287 = vmatprep.subr.mxu0 0.0
    %288 = vmatpush1.msra.mxu0 0.0
    %289 = vmatprep.subr.mxu0 0.0
    %290 = vmatpush1.msra.mxu0 0.0
    %291 = vmatprep.subr.mxu0 0.0
    %292 = vmatpush1.msra.mxu0 0.0
    %293 = vmatprep.subr.mxu0 0.0
    %294 = vmatpush1.msra.mxu0 0.0
    %295 = vmatprep.subr.mxu0 0.0
    %296 = vmatpush1.msra.mxu0 0.0
    %297 = vmatprep.subr.mxu0 0.0
    %298 = vmatpush1.msra.mxu0 0.0
    %299 = vmatprep.subr.mxu0 0.0
    %300 = vmatpush1.msra.mxu0 0.0
    %301 = vmatprep.subr.mxu0 0.0
    %302 = vmatpush1.msra.mxu0 0.0
    %303 = vmatprep.subr.mxu0 0.0
    %304 = vmatpush1.msra.mxu0 0.0
    %305 = vmatprep.subr.mxu0 0.0
    %306 = vmatpush1.msra.mxu0 0.0
    %307 = vmatprep.subr.mxu0 0.0
    %308 = vmatpush1.msra.mxu0 0.0
    %309 = vmatprep.subr.mxu0 0.0
    %310 = vmatpush1.msra.mxu0 0.0
    %311 = vmatprep.subr.mxu0 0.0
    %312 = vmatpush1.msra.mxu0 0.0
    %313 = vmatprep.mubr.f32.mxu0 0.0
    %314 = vmatmul.mubr.f32.gmra.mrb[0].mxu0 %v247
    %v315 = vpop.f32.mrb[0].mxu0
    %v316 = vadd.f32 0.0, %v315
    %v317 = vpop.f32.mrb[0].mxu0
    %318 = vdwg.mxu0
    %319 = vst [vmem:[#allocation3] sm:$0xff] %v316
    %320 = vadd.xlane.f32.xlu0 %v316
    %v321 = vpop.xlane.xlu0 %320
    %v322 = vadd.f32 %v321, 0.0
    %v323 = vld [vmem:[%s196] sm:$0xff]
    %v324 = vmul.f32 %v323, %v225
    %v325 = vadd.f32 %v324, %v231
    %vm326 = vcmp.gt.f32.partialorder %v325, 0.0
    %v327 = vmin.f32 %v325, 0.0
    %v328 = vmul.f32 %v327, 1.442695
    %v329 = vpow.pop %v328
    %v330 = vsub.f32 %v329, 1.0
    %v331 = vsel %vm326, %v325, %v330
    %332 = vrot.lane.b32.xlu0 %v331, 1
    %v333 = vpop.permute.xlu0 %332
    %v334 = vsel %vm32, 0.0, %v333
    %335 = vrot.lane.b32.xlu0 %v331, 127
    %v336 = vpop.permute.xlu0 %335
    %v337 = vsel %vm36, 0.0, %v336
    %338 = vmatprep.subr.mxu0 0.0
    %339 = vmatpush1.msra.mxu0 %v334
    %340 = vmatprep.subr.mxu0 0.0
    %341 = vmatpush1.msra.mxu0 %v331
    %342 = vmatprep.subr.mxu0 0.0
    %343 = vmatpush1.msra.mxu0 %v337
    %344 = vmatprep.subr.mxu0 0.0
    %345 = vmatpush1.msra.mxu0 0.0
    %346 = vmatprep.subr.mxu0 0.0
    %347 = vmatpush1.msra.mxu0 0.0
    %348 = vmatprep.subr.mxu0 0.0
    %349 = vmatpush1.msra.mxu0 0.0
    %350 = vmatprep.subr.mxu0 0.0
    %351 = vmatpush1.msra.mxu0 0.0
    %352 = vmatprep.subr.mxu0 0.0
    %353 = vmatpush1.msra.mxu0 0.0
    %354 = vmatprep.subr.mxu0 0.0
    %355 = vmatpush1.msra.mxu0 0.0
    %356 = vmatprep.subr.mxu0 0.0
    %357 = vmatpush1.msra.mxu0 0.0
    %358 = vmatprep.subr.mxu0 0.0
    %359 = vmatpush1.msra.mxu0 0.0
    %360 = vmatprep.subr.mxu0 0.0
    %361 = vmatpush1.msra.mxu0 0.0
    %362 = vmatprep.subr.mxu0 0.0
    %363 = vmatpush1.msra.mxu0 0.0
    %364 = vmatprep.subr.mxu0 0.0
    %365 = vmatpush1.msra.mxu0 0.0
    %366 = vmatprep.subr.mxu0 0.0
    %367 = vmatpush1.msra.mxu0 0.0
    %368 = vmatprep.subr.mxu0 0.0
    %369 = vmatpush1.msra.mxu0 0.0
    %370 = vmatprep.subr.mxu0 0.0
    %371 = vmatpush1.msra.mxu0 0.0
    %372 = vmatprep.subr.mxu0 0.0
    %373 = vmatpush1.msra.mxu0 0.0
    %374 = vmatprep.subr.mxu0 0.0
    %375 = vmatpush1.msra.mxu0 0.0
    %376 = vmatprep.subr.mxu0 0.0
    %377 = vmatpush1.msra.mxu0 0.0
    %378 = vmatprep.subr.mxu0 0.0
    %379 = vmatpush1.msra.mxu0 0.0
    %380 = vmatprep.subr.mxu0 0.0
    %381 = vmatpush1.msra.mxu0 0.0
    %382 = vmatprep.subr.mxu0 0.0
    %383 = vmatpush1.msra.mxu0 0.0
    %384 = vmatprep.subr.mxu0 0.0
    %385 = vmatpush1.msra.mxu0 0.0
    %386 = vmatprep.subr.mxu0 0.0
    %387 = vmatpush1.msra.mxu0 0.0
    %388 = vmatprep.subr.mxu0 0.0
    %389 = vmatpush1.msra.mxu0 0.0
    %390 = vmatprep.subr.mxu0 0.0
    %391 = vmatpush1.msra.mxu0 0.0
    %392 = vmatprep.subr.mxu0 0.0
    %393 = vmatpush1.msra.mxu0 0.0
    %394 = vmatprep.subr.mxu0 0.0
    %395 = vmatpush1.msra.mxu0 0.0
    %396 = vmatprep.subr.mxu0 0.0
    %397 = vmatpush1.msra.mxu0 0.0
    %398 = vmatprep.subr.mxu0 0.0
    %399 = vmatpush1.msra.mxu0 0.0
    %400 = vmatprep.subr.mxu0 0.0
    %401 = vmatpush1.msra.mxu0 0.0
    %402 = vmatprep.mubr.f32.mxu0 0.0
    %403 = vmatmul.mubr.f32.gmra.mrb[0].mxu0 %v247
    %v404 = vpop.f32.mrb[0].mxu0
    %v405 = vadd.f32 0.0, %v404
    %v406 = vpop.f32.mrb[0].mxu0
    %407 = vdwg.mxu0
    %s408 = scalar_lea.vmem [#allocation3], 8
    %409 = vst [vmem:[%s408] sm:$0xff] %v405
    %410 = vadd.xlane.f32.xlu0 %v405
    %v411 = vpop.xlane.xlu0 %410
    %v412 = vadd.f32 %v322, %v411
    %v413 = vmul.f32 %v412, 0.00390625
    %v414 = vld [vmem:[#allocation3] sm:$0xff]
    %v415 = vsub.f32 %v414, %v413
    %v416 = vmul.f32 %v415, %v415
    %417 = vadd.xlane.f32.xlu0 %v416
    %v418 = vpop.xlane.xlu0 %417
    %v419 = vadd.f32 %v418, 0.0
    %v420 = vld [vmem:[%s408] sm:$0xff]
    %v421 = vsub.f32 %v420, %v413
    %v422 = vmul.f32 %v421, %v421
    %423 = vadd.xlane.f32.xlu0 %v422
    %v424 = vpop.xlane.xlu0 %423
    %v425 = vadd.f32 %v419, %v424
    %v426 = vmul.f32 %v425, 0.00390625
    %v427 = vadd.f32 %v426, 1e-05
    %v428 = vrsqrt.pop %v427
    %v429 = vld [vmem:[%s5] sm:$0xff]
    %v430 = vmul.f32 %v429, %v428
    %v431 = vld [vmem:[%s6] sm:$0xff]
    %v432 = vmul.f32 %v413, %v430
    %v433 = vsub.f32 %v431, %v432
    %v434 = vld [vmem:[%s0] sm:$0xff]
    %436 = vset.pattern.permute.xlu0 0
    %437 = vperm.xlu0 %436, %v430
    %v438 = vpop.permute.xlu0 %437
    %v440 = vmul.f32 %v414, %v438
    %v441 = vadd.f32 %v434, %v440
    %443 = vset.pattern.permute.xlu0 0
    %444 = vperm.xlu0 %443, %v433
    %v445 = vpop.permute.xlu0 %444
    %v447 = vadd.f32 %v441, %v445
    %vm448 = vcmp.gt.f32.partialorder %v447, 0.0
    %v449 = vmin.f32 %v447, 0.0
    %v450 = vmul.f32 %v449, 1.442695
    %v451 = vpow.pop %v450
    %v452 = vsub.f32 %v451, 1.0
    %v453 = vsel %vm448, %v447, %v452
    %454 = vst [vmem:[#allocation4] sm:$0xff] %v453
    %v455 = vld [vmem:[%s118] sm:$0xff]
    %v456 = vld [vmem:[%s408] sm:$0xff]
    %v457 = vmul.f32 %v456, %v438
    %v458 = vadd.f32 %v455, %v457
    %v459 = vadd.f32 %v458, %v445
    %vm460 = vcmp.gt.f32.partialorder %v459, 0.0
    %v461 = vmin.f32 %v459, 0.0
    %v462 = vmul.f32 %v461, 1.442695
    %v463 = vpow.pop %v462
    %v464 = vsub.f32 %v463, 1.0
    %v465 = vsel %vm460, %v459, %v464
    %s466 = scalar_lea.vmem [#allocation4], 8
    %467 = vst [vmem:[%s466] sm:$0xff] %v465
    // Predicated region
    $region30: #{tpu_custom_call.1} parent=1 // pred_check
      _
    $region31: #{tpu_custom_call.1} parent=1 // pred_check_branch
      %469 = sbr.rel (0) target = $region33
    $region32: #{tpu_custom_call.1} parent=1 // pred_region
      %s471 = ssub.s32 256, 256
      %472 = vsyncadd [#allocation5], %s471
      %s473 = sshll.u32 [#allocation4], 4
      %s474 = int_to_ptr.vmem [resolvable:$true] %s473
      %479 = dma.vmem_to_hbm [thread:$0]  %s474, 256, %s7, [#allocation5], 128, 128, 8
    $region33: #{tpu_custom_call.1} parent=1 // pred_fallthru
      _
    // Predicated region
    $region34: #{tpu_custom_call.1} parent=1 // pred_check
      _
    $region35: #{tpu_custom_call.1} parent=1 // pred_check_branch
      %481 = sbr.rel (0) target = $region37
    $region36: #{tpu_custom_call.1} parent=1 // pred_region
      %482 = dma.done [#allocation5], 256
    $region37: #{tpu_custom_call.1} parent=1 // pred_fallthru
      _
    %483 = vsyncpa [#allocation5], 1

</llo_original>
